<compile_context>
chip_gen: v6e
topology: v6e:2x2x1
jax: 0.10.0
libtpu: 0.0.40
codegen_flags: <defaults>
</compile_context>

<pallas_src>
from typing import Optional, Dict, Any, Tuple

import jax
import jax.numpy as jnp
from jax.experimental import pallas as pl
from jax.experimental.pallas import tpu as pltpu


# ----------------------------------------------------------------------------
# Helpers
# ----------------------------------------------------------------------------

def _round_up(x: int, m: int) -> int:
    return (x + m - 1) // m * m


# ----------------------------------------------------------------------------
# Pallas kernels
# ----------------------------------------------------------------------------

def _proj_kernel(feat_ref, w_ref, b_ref, out_ref, acc_ref):
    # Tiled (tm, tk) @ (tk, tn) with f32 accumulator; bias added once at the
    # final K step (correctness guard for the tiled reduction axis).
    k = pl.program_id(2)

    @pl.when(k == 0)
    def _():
        acc_ref[...] = jnp.zeros_like(acc_ref)

    acc_ref[...] += jnp.dot(feat_ref[...], w_ref[...],
                            preferred_element_type=jnp.float32)

    @pl.when(k == pl.num_programs(2) - 1)
    def _():
        out_ref[...] = (acc_ref[...] + b_ref[...]).astype(out_ref.dtype)


def _log_softmax_kernel(logits_ref, out_ref):
    x = logits_ref[...]
    m = jnp.max(x, axis=-1, keepdims=True)
    s = x - m
    lse = jnp.log(jnp.sum(jnp.exp(s), axis=-1, keepdims=True))
    out_ref[...] = s - lse


def _softmax_kernel(logits_ref, out_ref):
    x = logits_ref[...]
    m = jnp.max(x, axis=-1, keepdims=True)
    e = jnp.exp(x - m)
    denom = jnp.sum(e, axis=-1, keepdims=True)
    # approx reciprocal -> EUP slot, nearly free alongside the VPU work.
    out_ref[...] = e * pl.reciprocal(denom, approx=True)


def _softmax_and_log_softmax_kernel(logits_ref, p_ref, lp_ref):
    # Fused: one read of the logits tile, shared max/sum, two outputs.
    x = logits_ref[...]
    m = jnp.max(x, axis=-1, keepdims=True)
    s = x - m
    e = jnp.exp(s)
    denom = jnp.sum(e, axis=-1, keepdims=True)
    p_ref[...] = e * pl.reciprocal(denom, approx=True)
    lp_ref[...] = s - jnp.log(denom)


# ----------------------------------------------------------------------------
# Wrappers
# ----------------------------------------------------------------------------

def output_layer_pallas(features_2d: jax.Array, w: jax.Array, b: jax.Array,
                        *, tm: int = 256, tn: int = 512, tk: int = 512
                        ) -> jax.Array:
    """(M, D) @ (D, V) + b -> (M, V) f32, tiled over grid (M//tm, V//tn, D//tk)."""
    M, D = features_2d.shape
    Dw, V = w.shape
    assert D == Dw and b.shape == (V,)

    # Tile sizes: full-extent when the dim is small, (8,128)-aligned otherwise.
    tm_eff = min(tm, _round_up(M, 8))
    assert tm_eff % 8 == 0
    Mp = _round_up(M, tm_eff)

    if D > tk:
        assert tk % 128 == 0
        tk_eff = tk
    else:
        tk_eff = D
    Dp = _round_up(D, tk_eff)

    if V > tn:
        assert tn % 128 == 0
        tn_eff = tn
    else:
        tn_eff = V
    Vp = _round_up(V, tn_eff)

    x = features_2d.astype(w.dtype)
    if (Mp, Dp) != (M, D):
        x = jnp.pad(x, ((0, Mp - M), (0, Dp - D)))
    wp = w
    if (Dp, Vp) != (D, V):
        wp = jnp.pad(w, ((0, Dp - D), (0, Vp - V)))
    bp = b.astype(jnp.float32)
    if Vp != V:
        bp = jnp.pad(bp, (0, Vp - V))
    bp = bp.reshape(1, Vp)

    grid = (Mp // tm_eff, Vp // tn_eff, Dp // tk_eff)

    out = pl.pallas_call(
        _proj_kernel,
        out_shape=jax.ShapeDtypeStruct((Mp, Vp), jnp.float32),
        grid_spec=pltpu.PrefetchScalarGridSpec(
            num_scalar_prefetch=0,
            grid=grid,
            in_specs=[
                pl.BlockSpec((tm_eff, tk_eff), lambda i, j, k: (i, k)),
                pl.BlockSpec((tk_eff, tn_eff), lambda i, j, k: (k, j)),
                pl.BlockSpec((1, tn_eff), lambda i, j, k: (0, j)),
            ],
            out_specs=pl.BlockSpec((tm_eff, tn_eff), lambda i, j, k: (i, j)),
            scratch_shapes=[pltpu.VMEM((tm_eff, tn_eff), jnp.float32)],
        ),
        compiler_params=pltpu.CompilerParams(
            dimension_semantics=("parallel", "parallel", "arbitrary"),
            vmem_limit_bytes=32 * 1024 * 1024,
        ),
        cost_estimate=pl.CostEstimate(
            flops=2 * Mp * Dp * Vp,
            transcendentals=0,
            bytes_accessed=(Mp * Dp * x.dtype.itemsize
                            + Dp * Vp * wp.dtype.itemsize
                            + Vp * 4
                            + Mp * Vp * 4),
        ),
    )(x, wp, bp)

    if (Mp, Vp) != (M, V):
        out = out[:M, :V]
    return out


def _row_tiled_call(kernel, logits_2d: jax.Array, num_outputs: int, tm: int):
    """Run a row-tiled (tm, V) kernel over (M, V) logits; pads M if needed."""
    M, V = logits_2d.shape
    tm_eff = min(tm, _round_up(M, 8))
    Mp = _round_up(M, tm_eff)

    x = logits_2d.astype(jnp.float32)   # keep softmax math in f32 (v5e-safe)
    if Mp != M:
        x = jnp.pad(x, ((0, Mp - M), (0, 0)))

    out_shape = tuple(jax.ShapeDtypeStruct((Mp, V), jnp.float32)
                      for _ in range(num_outputs))
    out_specs = [pl.BlockSpec((tm_eff, V), lambda i: (i, 0))
                 for _ in range(num_outputs)]

    outs = pl.pallas_call(
        kernel,
        out_shape=out_shape,
        grid_spec=pltpu.PrefetchScalarGridSpec(
            num_scalar_prefetch=0,
            grid=(Mp // tm_eff,),
            in_specs=[pl.BlockSpec((tm_eff, V), lambda i: (i, 0))],
            out_specs=out_specs,
        ),
        compiler_params=pltpu.CompilerParams(
            dimension_semantics=("parallel",),
            vmem_limit_bytes=32 * 1024 * 1024,
        ),
    )(x)

    if not isinstance(outs, (tuple, list)):
        outs = (outs,)
    if Mp != M:
        outs = tuple(o[:M] for o in outs)
    return tuple(outs)


def normalize_probs_pallas(logits_2d: jax.Array, log_probs: bool,
                           *, tm: int = 256) -> jax.Array:
    kernel = _log_softmax_kernel if log_probs else _softmax_kernel
    (out,) = _row_tiled_call(kernel, logits_2d, 1, tm)
    return out


def normalize_probs_both_pallas(logits_2d: jax.Array, *, tm: int = 256
                                ) -> Tuple[jax.Array, jax.Array]:
    p, lp = _row_tiled_call(_softmax_and_log_softmax_kernel, logits_2d, 2, tm)
    return p, lp


# ----------------------------------------------------------------------------
# Minimal concrete FairseqDecoder
# ----------------------------------------------------------------------------

class FairseqDecoderPallas:
    """Minimal concrete instantiation of fairseq's abstract FairseqDecoder.

    extract_features: embedding lookup -> (B, T, D)
    output_layer:     linear projection -> (B, T, V)   (tiled Pallas matmul)
    get_normalized_probs: softmax / log_softmax        (row-tiled Pallas kernel)
    """

    def __init__(self, vocab_size: int, embed_dim: int, key: jax.Array):
        # TODO(synk): extract_features / output_layer are abstract
        # (NotImplementedError) in the base class; this is a deterministic
        # minimal concrete instantiation so the forward composition is runnable.
        self.vocab_size = vocab_size
        self.embed_dim = embed_dim
        self.onnx_trace = False
        k_emb, k_w, k_b = jax.random.split(key, 3)
        self.embed = jax.random.normal(k_emb, (vocab_size, embed_dim), jnp.float32) * 0.02
        # bf16 weights halve HBM traffic / VMEM per tile and double effective
        # MXU rate; the MXU still accumulates in f32.
        self.out_w = (jax.random.normal(k_w, (embed_dim, vocab_size), jnp.float32)
                      * 0.02).astype(jnp.bfloat16)
        self.out_b = jax.random.normal(k_b, (vocab_size,), jnp.float32) * 0.02

    # --- forward = extract_features -> output_layer ---
    def forward(self, prev_output_tokens: jax.Array,
                encoder_out: Optional[Dict[str, Any]] = None
                ) -> Tuple[jax.Array, Dict[str, Any]]:
        x, extra = self.extract_features(prev_output_tokens, encoder_out=encoder_out)
        x = self.output_layer(x)
        return x, extra

    def extract_features(self, prev_output_tokens: jax.Array,
                         encoder_out: Optional[Dict[str, Any]] = None
                         ) -> Tuple[jax.Array, Dict[str, Any]]:
        # (B, T) int32 -> (B, T, D): glue gather stays in plain JAX.
        feats = jnp.take(self.embed, prev_output_tokens, axis=0)
        return feats, {"attn": None, "encoder_out": encoder_out}

    def output_layer(self, features: jax.Array) -> jax.Array:
        B, T, D = features.shape
        logits_2d = output_layer_pallas(
            features.reshape(B * T, D).astype(jnp.bfloat16),
            self.out_w, self.out_b)
        return logits_2d.reshape(B, T, self.vocab_size)

    def get_normalized_probs(self, net_output, log_probs: bool, sample=None) -> jax.Array:
        logits = net_output[0]
        B, T, V = logits.shape
        out_2d = normalize_probs_pallas(logits.reshape(B * T, V), log_probs)
        return out_2d.reshape(B, T, V)

    def get_normalized_probs_both(self, net_output, sample=None
                                  ) -> Tuple[jax.Array, jax.Array]:
        # Fused path: probs and log-probs from a single pass over the logits.
        logits = net_output[0]
        B, T, V = logits.shape
        p2d, lp2d = normalize_probs_both_pallas(logits.reshape(B * T, V))
        return p2d.reshape(B, T, V), lp2d.reshape(B, T, V)

    def max_positions(self):
        return 1e6


# ----------------------------------------------------------------------------
# Demo / self-check
# ----------------------------------------------------------------------------

if __name__ == "__main__":
    key = jax.random.PRNGKey(0)
    k_model, k_tok = jax.random.split(key)

    batch, tgt_len, embed_dim, vocab = 2, 8, 32, 128
    decoder = FairseqDecoderPallas(vocab_size=vocab, embed_dim=embed_dim, key=k_model)

    prev_output_tokens = jax.random.randint(k_tok, (batch, tgt_len), 0, vocab, jnp.int32)

    logits, extra = decoder.forward(prev_output_tokens, encoder_out=None)
    probs, log_probs = decoder.get_normalized_probs_both((logits, extra))
    log_probs_single = decoder.get_normalized_probs((logits, extra), log_probs=True)
    probs_single = decoder.get_normalized_probs((logits, extra), log_probs=False)

    jax.block_until_ready((logits, probs, log_probs, log_probs_single, probs_single))

    # Reference checks in plain JAX (same bf16 inputs, f32 accumulation).
    feats = jnp.take(decoder.embed, prev_output_tokens, axis=0)
    ref_logits = (jnp.dot(feats.astype(jnp.bfloat16), decoder.out_w,
                          preferred_element_type=jnp.float32)
                  + decoder.out_b)
    ref_logprobs = jax.nn.log_softmax(ref_logits, axis=-1)
    ref_probs = jax.nn.softmax(ref_logits, axis=-1)

    assert logits.shape == (batch, tgt_len, vocab)
    assert jnp.allclose(logits, ref_logits, atol=1e-3, rtol=1e-3)
    assert jnp.allclose(log_probs, ref_logprobs, atol=1e-3, rtol=1e-3)
    assert jnp.allclose(log_probs_single, ref_logprobs, atol=1e-3, rtol=1e-3)
    assert jnp.allclose(probs, ref_probs, atol=1e-4, rtol=5e-3)
    assert jnp.allclose(probs_single, ref_probs, atol=1e-4, rtol=5e-3)
    assert jnp.allclose(jnp.sum(probs, axis=-1), 1.0, atol=1e-2)

    # Exercise the fully tiled projection path (multi-block grid on M, V, K).
    kx, kw, kb = jax.random.split(jax.random.PRNGKey(1), 3)
    Mt, Dt, Vt = 16, 256, 256
    xt = (jax.random.normal(kx, (Mt, Dt), jnp.float32) * 0.1).astype(jnp.bfloat16)
    wt = (jax.random.normal(kw, (Dt, Vt), jnp.float32) * 0.1).astype(jnp.bfloat16)
    bt = jax.random.normal(kb, (Vt,), jnp.float32) * 0.1
    out_t = output_layer_pallas(xt, wt, bt, tm=8, tn=128, tk=128)   # grid (2, 2, 2)
    jax.block_until_ready(out_t)
    ref_t = jnp.dot(xt, wt, preferred_element_type=jnp.float32) + bt
    assert jnp.allclose(out_t, ref_t, atol=1e-3, rtol=1e-3)

    print("KERNEL_OK")
</pallas_src>

<mosaic_0001>
module attributes {stable_mosaic.version = 11 : i64} {
  func.func @_proj_kernel(%arg0: i32, %arg1: i32, %arg2: i32, %arg3: memref<16x32xbf16, #tpu.memory_space<vmem>>, %arg4: memref<32x128xbf16, #tpu.memory_space<vmem>>, %arg5: memref<1x128xf32, #tpu.memory_space<vmem>>, %arg6: memref<16x128xf32, #tpu.memory_space<vmem>>, %arg7: memref<16x128xf32, #tpu.memory_space<vmem>>) attributes {dimension_semantics = [#tpu.dimension_semantics<parallel>, #tpu.dimension_semantics<parallel>, #tpu.dimension_semantics<arbitrary>], iteration_bounds = array<i64: 1, 1, 1>, scalar_prefetch = 0 : i64, scratch_operands = 1 : i64, tpu.core_type = #tpu.core_type<tc>, window_params = [{transform_indices = @transform_0, window_bounds = array<i64: 16, 32>}, {transform_indices = @transform_1, window_bounds = array<i64: 32, 128>}, {transform_indices = @transform_2, window_bounds = array<i64: 1, 128>}, {transform_indices = @transform_3, window_bounds = array<i64: 16, 128>}]} {
    %c0_i32 = arith.constant 0 : i32
    %0 = arith.cmpi eq, %arg2, %c0_i32 : i32
    %1 = arith.extui %0 : i1 to i32
    %c0_i32_0 = arith.constant 0 : i32
    %2 = arith.cmpi ne, %1, %c0_i32_0 : i32
    scf.if %2 {
      %cst_10 = arith.constant 0.000000e+00 : f32
      %12 = vector.broadcast %cst_10 : f32 to vector<16x128xf32>
      %c0_11 = arith.constant 0 : index
      %c0_12 = arith.constant 0 : index
      %13 = vector.load %arg7[%c0_11, %c0_12] : memref<16x128xf32, #tpu.memory_space<vmem>>, vector<16x128xf32>
      tpu.vector_store %arg7[%c0_11, %c0_12], %12 {strides = array<i32>} : memref<16x128xf32, #tpu.memory_space<vmem>>, vector<16x128xf32>,
    } else {
    }
    %c0 = arith.constant 0 : index
    %c0_1 = arith.constant 0 : index
    %3 = vector.load %arg7[%c0, %c0_1] : memref<16x128xf32, #tpu.memory_space<vmem>>, vector<16x128xf32>
    %c0_2 = arith.constant 0 : index
    %c0_3 = arith.constant 0 : index
    %4 = vector.load %arg3[%c0_2, %c0_3] : memref<16x32xbf16, #tpu.memory_space<vmem>>, vector<16x32xbf16>
    %c0_4 = arith.constant 0 : index
    %c0_5 = arith.constant 0 : index
    %5 = vector.load %arg4[%c0_4, %c0_5] : memref<32x128xbf16, #tpu.memory_space<vmem>>, vector<32x128xbf16>
    %cst = arith.constant dense<0.000000e+00> : vector<16x128xf32>
    %6 = tpu.matmul %4, %5, %cst {dimension_numbers = #tpu.dot_dimension_numbers<[1], [0], [0], [1], [0, 0, 1, 1], [], []>} : vector<16x32xbf16>, vector<32x128xbf16>, vector<16x128xf32> -> vector<16x128xf32>
    %7 = arith.addf %3, %6 : vector<16x128xf32>
    %c0_6 = arith.constant 0 : index
    %c0_7 = arith.constant 0 : index
    %8 = vector.load %arg7[%c0_6, %c0_7] : memref<16x128xf32, #tpu.memory_space<vmem>>, vector<16x128xf32>
    tpu.vector_store %arg7[%c0_6, %c0_7], %7 {strides = array<i32>} : memref<16x128xf32, #tpu.memory_space<vmem>>, vector<16x128xf32>,
    %c0_i32_8 = arith.constant 0 : i32
    %9 = arith.cmpi eq, %arg2, %c0_i32_8 : i32
    %10 = arith.extui %9 : i1 to i32
    %c0_i32_9 = arith.constant 0 : i32
    %11 = arith.cmpi ne, %10, %c0_i32_9 : i32
    scf.if %11 {
      %c0_10 = arith.constant 0 : index
      %c0_11 = arith.constant 0 : index
      %12 = vector.load %arg7[%c0_10, %c0_11] : memref<16x128xf32, #tpu.memory_space<vmem>>, vector<16x128xf32>
      %c0_12 = arith.constant 0 : index
      %c0_13 = arith.constant 0 : index
      %13 = vector.load %arg5[%c0_12, %c0_13] : memref<1x128xf32, #tpu.memory_space<vmem>>, vector<1x128xf32>
      %14 = vector.broadcast %13 : vector<1x128xf32> to vector<16x128xf32>
      %15 = arith.addf %12, %14 : vector<16x128xf32>
      %c0_14 = arith.constant 0 : index
      %c0_15 = arith.constant 0 : index
      %16 = vector.load %arg6[%c0_14, %c0_15] : memref<16x128xf32, #tpu.memory_space<vmem>>, vector<16x128xf32>
      tpu.vector_store %arg6[%c0_14, %c0_15], %15 {strides = array<i32>} : memref<16x128xf32, #tpu.memory_space<vmem>>, vector<16x128xf32>,
    } else {
    }
    return
  }
  func.func @transform_0(%arg0: i32, %arg1: i32, %arg2: i32) -> (i32, i32) {
    %c0_i32 = arith.constant 0 : i32
    return %arg0, %arg2 : i32, i32
  }
  func.func @transform_1(%arg0: i32, %arg1: i32, %arg2: i32) -> (i32, i32) {
    %c0_i32 = arith.constant 0 : i32
    return %arg2, %arg1 : i32, i32
  }
  func.func @transform_2(%arg0: i32, %arg1: i32, %arg2: i32) -> (i32, i32) {
    %c0_i32 = arith.constant 0 : i32
    %c0_i32_0 = arith.constant 0 : i32
    return %c0_i32, %arg1 : i32, i32
  }
  func.func @transform_3(%arg0: i32, %arg1: i32, %arg2: i32) -> (i32, i32) {
    %c0_i32 = arith.constant 0 : i32
    return %arg0, %arg1 : i32, i32
  }
}

</mosaic_0001>

<llo_original>
// kernel: tpu_custom_call.1
$region0: #{tpu_custom_call.1}
  #allocation0 [shape = 'u32[]', space=smem, size = 0x4, offset = 0x4, fixed_abs, tag = 'smem constant byte address 0x4 - core index']
  #allocation1 [shape = 'u32[144,128]{1,0:T(1,128)}', space=vmem, size = 0x12000, scoped, tag = 'internal scratch']
  #allocation2 [shape = 'f32[16,128]{1,0:T(8,128)}', space=vmem, size = 0x2000, scoped, tag = 'scratch operand']
  %s0 = inlined_call_operand.hbm [shape: bf16[16,32], index: 0, kind: input, shape index: {}]
  %s1 = inlined_call_operand.hbm [shape: bf16[32,128], index: 1, kind: input, shape index: {}]
  %s2 = inlined_call_operand.vmem [shape: f32[1,128], index: 2, kind: input, shape index: {}]
  %s3 = inlined_call_operand.hbm [shape: f32[16,128], index: 3, kind: output, shape index: {}]
  %s4 = sld [smem:[#allocation0]]
  $region38: #{tpu_custom_call.1} parent=0
    _
  %s6 = ssub.s32 1, %s4
  %s7 = scalar_select 0, %s6, %s4
  $region1: #{tpu_custom_call.1} parent=0
    #allocation3 [shape = 'u8[4096]{0}', space=vmem, size = 0x1000, scoped, tag = 'input window, operand 0, single buffered']
    #allocation4 [shape = 's32[1]{0}', space=sflag, size = 0x4, scoped, tag = 'scoped memory for tpu_custom_call.1']
    #allocation5 [shape = 's32[1]{0}', space=sflag, size = 0x4, scoped, tag = 'scoped memory for tpu_custom_call.1']
    #allocation6 [shape = 'u8[8192]{0}', space=vmem, size = 0x2000, scoped, tag = 'input window, operand 1, single buffered']
    #allocation7 [shape = 's32[1]{0}', space=sflag, size = 0x4, scoped, tag = 'scoped memory for tpu_custom_call.1']
    #allocation8 [shape = 'u8[8192]{0}', space=vmem, size = 0x2000, scoped, tag = 'output window, operand 0, single buffered']
    %8 = vsyncpa [#allocation4], 0
    %9 = vsyncpa [#allocation7], 0
    %10 = vsyncpa [#allocation5], 0
    // Predicated region
    $region2: #{tpu_custom_call.1} parent=1 // pred_check
      _
    $region3: #{tpu_custom_call.1} parent=1 // pred_check_branch
      %12 = sbr.rel (0) target = $region5
    $region4: #{tpu_custom_call.1} parent=1 // pred_region
      %s14 = ssub.s32 128, 128
      %15 = vsyncadd [#allocation4], %s14
      %s16 = sshll.u32 [#allocation3], 4
      %s17 = int_to_ptr.vmem [resolvable:$true] %s16
      %22 = dma.hbm_to_vmem [thread:$0]  %s0, 128, %s17, [#allocation4], 64, 64, 4
    $region5: #{tpu_custom_call.1} parent=1 // pred_fallthru
      _
    // Predicated region
    $region6: #{tpu_custom_call.1} parent=1 // pred_check
      _
    $region7: #{tpu_custom_call.1} parent=1 // pred_check_branch
      %24 = sbr.rel (0) target = $region9
    $region8: #{tpu_custom_call.1} parent=1 // pred_region
      %s26 = ssub.s32 256, 256
      %27 = vsyncadd [#allocation7], %s26
      %s28 = sshll.u32 [#allocation6], 4
      %s29 = int_to_ptr.vmem [resolvable:$true] %s28
      %34 = dma.hbm_to_vmem [thread:$0]  %s1, 256, %s29, [#allocation7], 64, 64, 4
    $region9: #{tpu_custom_call.1} parent=1 // pred_fallthru
      _
    // Predicated region
    $region10: #{tpu_custom_call.1} parent=1 // pred_check
      _
    $region11: #{tpu_custom_call.1} parent=1 // pred_check_branch
      %36 = sbr.rel (0) target = $region13
    $region12: #{tpu_custom_call.1} parent=1 // pred_region
      _
    $region13: #{tpu_custom_call.1} parent=1 // pred_fallthru
      _
    // Predicated region
    $region14: #{tpu_custom_call.1} parent=1 // pred_check
      _
    $region15: #{tpu_custom_call.1} parent=1 // pred_check_branch
      %38 = sbr.rel (0) target = $region17
    $region16: #{tpu_custom_call.1} parent=1 // pred_region
      %39 = dma.done [#allocation4], 128
    $region17: #{tpu_custom_call.1} parent=1 // pred_fallthru
      _
    // Predicated region
    $region18: #{tpu_custom_call.1} parent=1 // pred_check
      _
    $region19: #{tpu_custom_call.1} parent=1 // pred_check_branch
      %41 = sbr.rel (0) target = $region21
    $region20: #{tpu_custom_call.1} parent=1 // pred_region
      %42 = dma.done [#allocation7], 256
    $region21: #{tpu_custom_call.1} parent=1 // pred_fallthru
      _
    %p44 = scmp.eq.s32.totalorder 0, 0
    // Predicated region
    $region22: #{tpu_custom_call.1} parent=1 // pred_check
      %p45 = pneg %p44
    $region23: #{tpu_custom_call.1} parent=1 // pred_check_branch
      %47 = sbr.rel (%p45) target = $region25
    $region24: #{tpu_custom_call.1} parent=1 // pred_region
      %48 = vst [vmem:[#allocation2] sm:$0xff] 0.0
      %49 = vst [vmem:[#allocation2 + $0x8] sm:$0xff] 0.0
    $region25: #{tpu_custom_call.1} parent=1 // pred_fallthru
      _
    %v50 = vld [vmem:[#allocation2] sm:$0xff]
    %v51 = vld [vmem:[#allocation2 + $0x8] sm:$0xff]
    %v52 = vld [vmem:[#allocation3] sm:$0xf]
    %v53 = vld [vmem:[#allocation3 + $0x4] sm:$0xf]
    %v54 = vld [vmem:[#allocation6] sm:$0xf]
    %v55 = vld [vmem:[#allocation6 + $0x4] sm:$0xf]
    %v56 = vld [vmem:[#allocation6 + $0x8] sm:$0xf]
    %v57 = vld [vmem:[#allocation6 + $0xc] sm:$0xf]
    %v60 = vunpack.c.l.b16 %v52
    %v61 = vunpack.c.l.b16 %v53
    %v62 = vpack.c.b16 %v61, %v60
    %v67 = vunpack.c.l.b16 %v54
    %v68 = vunpack.c.l.b16 %v55
    %v69 = vunpack.c.l.b16 %v56
    %v70 = vunpack.c.l.b16 %v57
    %v71 = vpack.c.b16 %v68, %v67
    %v72 = vpack.c.b16 %v70, %v69
    %vm75 = vcmask 261120
    %v77 = vsel %vm75, %v62, 0
    %79 = vmatprep.subr.bf16.mxu0 0
    %80 = vmatpush1.bf16.msra.mxu0 0
    %81 = vmatprep.subr.bf16.mxu0 0
    %82 = vmatpush1.bf16.msra.mxu0 0
    %83 = vmatprep.subr.bf16.mxu0 0
    %84 = vmatpush1.bf16.msra.mxu0 0
    %85 = vmatprep.subr.bf16.mxu0 0
    %86 = vmatpush1.bf16.msra.mxu0 0
    %87 = vmatprep.subr.bf16.mxu0 0
    %88 = vmatpush1.bf16.msra.mxu0 0
    %89 = vmatprep.subr.bf16.mxu0 0
    %90 = vmatpush1.bf16.msra.mxu0 0
    %91 = vmatprep.subr.bf16.mxu0 0
    %92 = vmatpush1.bf16.msra.mxu0 %v72
    %93 = vmatprep.subr.bf16.mxu0 0
    %94 = vmatpush1.bf16.msra.mxu0 %v71
    %95 = vmatprep.subr.bf16.mxu0 0
    %96 = vmatpush2.bf16.msra.mxu0 0
    %97 = vmatprep.subr.bf16.mxu0 0
    %98 = vmatpush2.bf16.msra.mxu0 0
    %99 = vmatprep.subr.bf16.mxu0 0
    %100 = vmatpush2.bf16.msra.mxu0 0
    %101 = vmatprep.subr.bf16.mxu0 0
    %102 = vmatpush2.bf16.msra.mxu0 0
    %103 = vmatprep.subr.bf16.mxu0 0
    %104 = vmatpush2.bf16.msra.mxu0 0
    %105 = vmatprep.subr.bf16.mxu0 0
    %106 = vmatpush2.bf16.msra.mxu0 0
    %107 = vmatprep.subr.bf16.mxu0 0
    %108 = vmatpush2.bf16.msra.mxu0 0
    %109 = vmatprep.subr.bf16.mxu0 0
    %110 = vmatpush2.bf16.msra.mxu0 0
    %111 = vmatprep.mubr.bf16.mxu0 0
    %112 = vmatmul.mubr.bf16.gmra.mxu0 %v77
    %v113 = vpop.f32.mrf.mxu0
    %v114 = vadd.f32 0.0, %v113
    %v115 = vpop.f32.mrf.mxu0
    %v116 = vpop.f32.mrf.mxu0
    %v117 = vadd.f32 0.0, %v116
    %v118 = vpop.f32.mrf.mxu0
    %119 = vdwg.mxu0
    %v120 = vadd.f32 %v50, %v114
    %v121 = vadd.f32 %v51, %v117
    %122 = vst [vmem:[#allocation2] sm:$0xff] %v120
    %123 = vst [vmem:[#allocation2 + $0x8] sm:$0xff] %v121
    // Predicated region
    $region26: #{tpu_custom_call.1} parent=1 // pred_check
      %p124 = pneg %p44
    $region27: #{tpu_custom_call.1} parent=1 // pred_check_branch
      %126 = sbr.rel (%p124) target = $region29
    $region28: #{tpu_custom_call.1} parent=1 // pred_region
      %v127 = vld [vmem:[#allocation2] sm:$0xff]
      %v128 = vld [vmem:[#allocation2 + $0x8] sm:$0xff]
      %v129 = vld [vmem:[%s2] sm:$0x1]
      %v131 = vlaneseq
      %v132 = vshrl.u32 %v131, 7
      %v133 = vsub.s32 0, %v132
      %v134 = vrot.slane %v129, %v133
      %v136 = vadd.f32 %v127, %v134
      %v137 = vadd.f32 %v128, %v134
      %138 = vst [vmem:[#allocation8] sm:$0xff] %v136
      %139 = vst [vmem:[#allocation8 + $0x8] sm:$0xff] %v137
    $region29: #{tpu_custom_call.1} parent=1 // pred_fallthru
      _
    // Predicated region
    $region30: #{tpu_custom_call.1} parent=1 // pred_check
      _
    $region31: #{tpu_custom_call.1} parent=1 // pred_check_branch
      %141 = sbr.rel (0) target = $region33
    $region32: #{tpu_custom_call.1} parent=1 // pred_region
      %s143 = ssub.s32 256, 256
      %144 = vsyncadd [#allocation5], %s143
      %s145 = sshll.u32 [#allocation8], 4
      %s146 = int_to_ptr.vmem [resolvable:$true] %s145
      %151 = dma.vmem_to_hbm [thread:$0]  %s146, 256, %s3, [#allocation5], 128, 128, 8
    $region33: #{tpu_custom_call.1} parent=1 // pred_fallthru
      _
    // Predicated region
    $region34: #{tpu_custom_call.1} parent=1 // pred_check
      _
    $region35: #{tpu_custom_call.1} parent=1 // pred_check_branch
      %153 = sbr.rel (0) target = $region37
    $region36: #{tpu_custom_call.1} parent=1 // pred_region
      %154 = dma.done [#allocation5], 256
    $region37: #{tpu_custom_call.1} parent=1 // pred_fallthru
      _
    %155 = vsyncpa [#allocation4], 1
    %156 = vsyncpa [#allocation7], 1
    %157 = vsyncpa [#allocation5], 1

</llo_original>
